<compile_context>
chip_gen: v6e
topology: v6e:2x2x1
jax: 0.10.0
libtpu: 0.0.40
codegen_flags: <defaults>
</compile_context>

<pallas_src>
import functools

import jax
import jax.numpy as jnp
from jax import lax
from jax.experimental import pallas as pl
from jax.experimental.pallas import tpu as pltpu

_F32 = jnp.float32
_BF16 = jnp.bfloat16


# --------------------------------------------------------------------------- #
# Stage 1: similarity + lambda mixing + both GCN layers' row-local matmuls.    #
# --------------------------------------------------------------------------- #
def _stage1_kernel(feat_ref, featT_ref, adj_ref, adjn_ref, h1pre_ref, w2_ref, b2_ref,
                   rawqg_ref, qg_ref, logits_ref, *, lmd, num_heads):
    tm = feat_ref.shape[0]
    inv_heads = 1.0 / float(num_heads)

    # Multi-head weighted-cosine similarity: one (TM, K) @ (K, N) MXU matmul.
    # Features were precomputed, zero-padded and pre-transposed in the wrapper,
    # so there is no per-iteration VPU/XLU prologue here.
    sim = jnp.dot(feat_ref[...], featT_ref[...], preferred_element_type=_F32)   # (TM, N)
    raw_qg = jnp.maximum(sim * inv_heads, 0.0)          # ReLU(mean over heads)

    adj_blk = adj_ref[...].astype(_F32)                  # (TM, N), 0/1 exact in bf16
    adjn_blk = adjn_ref[...].astype(_F32)                # (TM, N)

    # Row-normalize (row sums are local to the row block) + lambda mixing; each
    # (TM, N) tile is produced and stored exactly once.
    row_sum = jnp.sum(raw_qg, axis=-1, keepdims=True)
    qg = raw_qg / jnp.maximum(row_sum, 1e-12)
    qg = (1.0 - lmd) * qg + lmd * adjn_blk
    rawqg_ref[...] = (1.0 - lmd) * raw_qg + lmd * adj_blk
    qg_bf = qg.astype(_BF16)
    qg_ref[...] = qg_bf

    # First GCN layer (h1_pre hoisted to the wrapper) with both adjacency
    # branches stacked into one (2*TM, N) @ (N, HID) matmul, then the
    # classifier matmul fused here so only lane-dense logits leave the kernel.
    a_both = jnp.concatenate([adjn_ref[...], qg_bf], axis=0)                    # (2*TM, N) bf16
    h1_both = jnp.maximum(
        jnp.dot(a_both, h1pre_ref[...], preferred_element_type=_F32), 0.0)      # (2*TM, HID)
    logits_both = (jnp.dot(h1_both.astype(_BF16), w2_ref[...],
                           preferred_element_type=_F32)
                   + b2_ref[...].astype(_F32))                                  # (2*TM, C_PAD)
    logits_ref[0] = logits_both[:tm].astype(_BF16)
    logits_ref[1] = logits_both[tm:].astype(_BF16)


# --------------------------------------------------------------------------- #
# Stage 2: second GCN propagation + masked lane-padded softmax + average.      #
# --------------------------------------------------------------------------- #
def _stage2_kernel(adjn_ref, qg_ref, logits_ref, qy_ref, *, num_class):
    # Per-branch propagation of the precomputed logits (no full-N recompute).
    z1 = jnp.dot(adjn_ref[...], logits_ref[0], preferred_element_type=_F32)     # (TM, C_PAD)
    z2 = jnp.dot(qg_ref[...], logits_ref[1], preferred_element_type=_F32)

    # Mask the lane-padded class columns, softmax each branch, average.
    col = lax.broadcasted_iota(jnp.int32, z1.shape, 1)
    valid = col < num_class
    neg = jnp.float32(-1e30)

    def _softmax(z):
        z = jnp.where(valid, z, neg)
        m = jnp.max(z, axis=-1, keepdims=True)
        e = jnp.exp(z - m)
        # Approx EUP reciprocal: row sums accurate to ~1e-2 (intentional trade-off).
        return e * pl.reciprocal(jnp.sum(e, axis=-1, keepdims=True), approx=True)

    qy_ref[...] = 0.5 * _softmax(z1) + 0.5 * _softmax(z2)


# --------------------------------------------------------------------------- #
# Wrapper: one-time precompute, VMEM-aware tiling, pallas_call plumbing.       #
# --------------------------------------------------------------------------- #
def _vmem_capacity_bytes():
    try:
        return int(pltpu.get_tpu_info().vmem_capacity_bytes)
    except Exception:
        return 64 * 1024 * 1024          # conservative (v7x per-TensorCore VMEM)


def _plan_tiles(n, kpad, hid, c_pad):
    """Pick the row tile TM and a vmem limit from the real VMEM footprint."""
    cap = _vmem_capacity_bytes()
    # Grid-invariant full-spec residents (assume pipeline double-buffers them).
    resident1 = 2 * (kpad * n * 2 + n * hid * 2 + hid * c_pad * 2 + c_pad * 4)   # stage 1
    resident2 = 2 * (2 * n * c_pad * 2)                                          # stage 2 (logits)
    resident = max(resident1, resident2)
    # Double-buffered row-block tiles (bf16 in, f32+bf16 out) ...
    per_row_io = 2 * (kpad * 2 + 2 * n * 2 + n * 4 + n * 2 + 2 * c_pad * 2)
    # ... plus in-body temporaries (sim f32, stacked A bf16, h1 f32, logits f32).
    per_row_tmp = n * 4 + 2 * n * 2 + 2 * hid * 4 + 2 * c_pad * 4
    per_row = per_row_io + per_row_tmp
    slack = 2 << 20

    budget = int(cap * 0.9) - resident - slack
    tm = max(8, (budget // max(per_row, 1)) // 8 * 8)
    tm = max(tm, 128)                  # keep the MXU well fed; never collapse to tiny tiles
    tm = min(tm, n)
    if tm < n:                         # keep TM an 8-aligned divisor of N (no masked edge blocks)
        while tm > 8 and n % tm != 0:
            tm -= 8
        if n % tm != 0:
            tm = n

    need = resident + tm * per_row + slack
    vmem_limit = int(min(cap, max(need, 32 << 20)))
    return tm, vmem_limit


def _full_spec(shape):
    nd = len(shape)
    return pl.BlockSpec(shape, lambda i, _nd=nd: (0,) * _nd)


def qg_qy_forward(x, adj, adj_norm, params, lmd):
    n, d = x.shape
    num_heads = int(params["gl_w"].shape[0])
    hid = int(params["w1"].shape[1])
    num_class = int(params["w2"].shape[1])
    c_pad = max(128, -(-num_class // 128) * 128)

    x = x.astype(_F32)
    adj_bf = adj.astype(_BF16)          # 0/1 entries -> exact in bf16
    adjn_bf = adj_norm.astype(_BF16)

    # ---- one-time (grid-invariant) precomputation, hoisted out of the kernels ----
    glw = params["gl_w"].astype(_F32)                                   # (H, D)
    xw = x[None, :, :] * glw[:, None, :]                                # (H, N, D)
    inv = lax.rsqrt(jnp.maximum(jnp.sum(xw * xw, axis=-1, keepdims=True), 1e-24))
    feat = jnp.transpose(xw * inv, (1, 0, 2)).reshape(n, num_heads * d)  # (N, H*D)
    k = num_heads * d
    kpad = -(-k // 128) * 128            # zero-pad contraction K (padded cols add 0 to the dot)
    if kpad != k:
        feat = jnp.pad(feat, ((0, 0), (0, kpad - k)))
    feat_bf = feat.astype(_BF16)         # (N, Kpad)  row-blocked LHS
    feat_t_bf = feat_bf.T                # (Kpad, N)  pre-transposed RHS (transposed once, here)

    h1_pre = (x @ params["w1"].astype(_F32)
              + params["b1"].astype(_F32)).astype(_BF16)                 # (N, HID) computed once

    # Lane-pad the classifier so every (., C) intermediate / store is 128-lane dense.
    w2p = jnp.zeros((hid, c_pad), _BF16).at[:, :num_class].set(params["w2"].astype(_BF16))
    b2p = jnp.zeros((1, c_pad), _F32).at[:, :num_class].set(params["b2"].astype(_F32))

    tm, vmem_limit = _plan_tiles(n, kpad, hid, c_pad)
    grid = (pl.cdiv(n, tm),)
    cparams = pltpu.CompilerParams(
        dimension_semantics=("parallel",),
        vmem_limit_bytes=vmem_limit,
    )

    row_nn = pl.BlockSpec((tm, n), lambda i: (i, 0))

    raw_qg, qg_bf16, logits = pl.pallas_call(
        functools.partial(_stage1_kernel, lmd=float(lmd), num_heads=num_heads),
        grid=grid,
        in_specs=[
            pl.BlockSpec((tm, kpad), lambda i: (i, 0)),   # feature row block (bf16)
            _full_spec((kpad, n)),                        # pre-transposed features (bf16)
            row_nn,                                       # adj row block (bf16)
            row_nn,                                       # adj_norm row block (bf16)
            _full_spec((n, hid)),                         # h1_pre = x@W1+b1 (bf16)
            _full_spec((hid, c_pad)),                     # W2 (bf16, lane padded)
            _full_spec((1, c_pad)),                       # b2 (f32, lane padded)
        ],
        out_specs=(
            row_nn,                                            # raw_qg (mixed, f32)
            row_nn,                                            # qg (mixed, bf16)
            pl.BlockSpec((2, tm, c_pad), lambda i: (0, i, 0)), # logits, both branches (bf16)
        ),
        out_shape=(
            jax.ShapeDtypeStruct((n, n), _F32),
            jax.ShapeDtypeStruct((n, n), _BF16),
            jax.ShapeDtypeStruct((2, n, c_pad), _BF16),
        ),
        compiler_params=cparams,
    )(feat_bf, feat_t_bf, adj_bf, adjn_bf, h1_pre, w2p, b2p)

    qy_pad = pl.pallas_call(
        functools.partial(_stage2_kernel, num_class=num_class),
        grid=grid,
        in_specs=[
            row_nn,                                    # adj_norm row block (bf16)
            row_nn,                                    # qg row block (bf16)
            _full_spec((2, n, c_pad)),                 # logits, both branches (bf16)
        ],
        out_specs=pl.BlockSpec((tm, c_pad), lambda i: (i, 0)),
        out_shape=jax.ShapeDtypeStruct((n, c_pad), _F32),
        compiler_params=cparams,
    )(adjn_bf, qg_bf16, logits)

    return qy_pad[:, :num_class], raw_qg


# --------------------------------------------------------------------------- #
# Parameter init + pure-JAX f32 reference (for validation).                    #
# --------------------------------------------------------------------------- #
def init_params(key, input_dim, hidden_dim, num_class, num_heads):
    k = jax.random.split(key, 5)
    gl_w = jax.random.normal(k[0], (num_heads, input_dim), jnp.float32)
    w1 = jax.random.normal(k[1], (input_dim, hidden_dim), jnp.float32) / jnp.sqrt(1.0 * input_dim)
    b1 = jnp.zeros((1, hidden_dim), jnp.float32)
    w2 = jax.random.normal(k[2], (hidden_dim, num_class), jnp.float32) / jnp.sqrt(1.0 * hidden_dim)
    b2 = jnp.zeros((1, num_class), jnp.float32)
    return {"gl_w": gl_w, "w1": w1, "b1": b1, "w2": w2, "b2": b2}


def _reference_forward(x, adj, adj_norm, params, lmd):
    glw = params["gl_w"]
    h = glw.shape[0]
    sim = jnp.zeros((x.shape[0], x.shape[0]), jnp.float32)
    for i in range(h):
        xw = x * glw[i:i + 1]
        nrm = jnp.maximum(jnp.sqrt(jnp.sum(xw * xw, axis=-1, keepdims=True)), 1e-12)
        xw_n = xw / nrm
        sim = sim + xw_n @ xw_n.T
    raw_qg = jnp.maximum(sim / h, 0.0)
    qg = raw_qg / jnp.maximum(jnp.sum(raw_qg, axis=-1, keepdims=True), 1e-12)
    qg = (1 - lmd) * qg + lmd * adj_norm
    raw_out = (1 - lmd) * raw_qg + lmd * adj

    def gcn(a):
        h1 = jnp.maximum(a @ (x @ params["w1"] + params["b1"]), 0.0)
        logits = a @ (h1 @ params["w2"] + params["b2"])
        return jax.nn.softmax(logits, axis=-1)

    qy = 0.5 * gcn(adj_norm) + 0.5 * gcn(qg)
    return qy, raw_out


if __name__ == "__main__":
    N, D, HID, C, H = 16, 32, 32, 4, 4
    LMD = 0.5

    key = jax.random.PRNGKey(0)
    k_x, k_a, k_p = jax.random.split(key, 3)

    x = jax.random.normal(k_x, (N, D), jnp.float32)

    # deterministic symmetric adjacency with self-loops + its symmetric normalization
    a_rand = jax.random.uniform(k_a, (N, N))
    adj = (a_rand + a_rand.T > 1.0).astype(jnp.float32)
    adj = jnp.clip(adj + jnp.eye(N, dtype=jnp.float32), 0.0, 1.0)
    deg = jnp.sum(adj, axis=-1)
    d_inv_sqrt = 1.0 / jnp.sqrt(jnp.maximum(deg, 1e-12))
    adj_norm = adj * d_inv_sqrt[:, None] * d_inv_sqrt[None, :]

    params = init_params(k_p, D, HID, C, H)

    qy, raw_qg = qg_qy_forward(x, adj, adj_norm, params, LMD)
    qy, raw_qg = jax.block_until_ready((qy, raw_qg))

    # sanity checks
    assert qy.shape == (N, C) and raw_qg.shape == (N, N)
    assert bool(jnp.all(jnp.isfinite(qy))) and bool(jnp.all(jnp.isfinite(raw_qg)))
    assert bool(jnp.allclose(jnp.sum(qy, axis=-1), 1.0, atol=1e-2))

    # validate against a pure-JAX f32 reference (bf16 matmul operands -> loose tol)
    qy_ref, raw_ref = _reference_forward(x, adj, adj_norm, params, LMD)
    assert bool(jnp.allclose(qy, qy_ref, atol=0.1))
    assert bool(jnp.allclose(raw_qg, raw_ref, atol=0.1))

    print("KERNEL_OK")
</pallas_src>

<mosaic_0001>
module attributes {stable_mosaic.version = 11 : i64} {
  func.func @_stage1_kernel(%arg0: i32, %arg1: memref<16x128xbf16, #tpu.memory_space<vmem>>, %arg2: memref<128x16xbf16, #tpu.memory_space<vmem>>, %arg3: memref<16x16xbf16, #tpu.memory_space<vmem>>, %arg4: memref<16x16xbf16, #tpu.memory_space<vmem>>, %arg5: memref<16x32xbf16, #tpu.memory_space<vmem>>, %arg6: memref<32x128xbf16, #tpu.memory_space<vmem>>, %arg7: memref<1x128xf32, #tpu.memory_space<vmem>>, %arg8: memref<16x16xf32, #tpu.memory_space<vmem>>, %arg9: memref<16x16xbf16, #tpu.memory_space<vmem>>, %arg10: memref<2x16x128xbf16, #tpu.memory_space<vmem>>) attributes {dimension_semantics = [#tpu.dimension_semantics<parallel>], iteration_bounds = array<i64: 1>, scalar_prefetch = 0 : i64, scratch_operands = 0 : i64, tpu.core_type = #tpu.core_type<tc>, window_params = [{transform_indices = @transform_0, window_bounds = array<i64: 16, 128>}, {pipeline_mode = #tpu.pipeline_mode<synchronous>, transform_indices = @transform_1, window_bounds = array<i64: 128, 16>}, {transform_indices = @transform_2, window_bounds = array<i64: 16, 16>}, {transform_indices = @transform_3, window_bounds = array<i64: 16, 16>}, {pipeline_mode = #tpu.pipeline_mode<synchronous>, transform_indices = @transform_4, window_bounds = array<i64: 16, 32>}, {pipeline_mode = #tpu.pipeline_mode<synchronous>, transform_indices = @transform_5, window_bounds = array<i64: 32, 128>}, {pipeline_mode = #tpu.pipeline_mode<synchronous>, transform_indices = @transform_6, window_bounds = array<i64: 1, 128>}, {transform_indices = @transform_7, window_bounds = array<i64: 16, 16>}, {transform_indices = @transform_8, window_bounds = array<i64: 16, 16>}, {transform_indices = @transform_9, window_bounds = array<i64: 2, 16, 128>}]} {
    %c0 = arith.constant 0 : index
    %c0_0 = arith.constant 0 : index
    %0 = vector.load %arg1[%c0, %c0_0] : memref<16x128xbf16, #tpu.memory_space<vmem>>, vector<16x128xbf16>
    %c0_1 = arith.constant 0 : index
    %c0_2 = arith.constant 0 : index
    %1 = vector.load %arg2[%c0_1, %c0_2] : memref<128x16xbf16, #tpu.memory_space<vmem>>, vector<128x16xbf16>
    %cst = arith.constant dense<0.000000e+00> : vector<16x16xf32>
    %2 = tpu.matmul %0, %1, %cst {dimension_numbers = #tpu.dot_dimension_numbers<[1], [0], [0], [1], [0, 0, 1, 1], [], []>} : vector<16x128xbf16>, vector<128x16xbf16>, vector<16x16xf32> -> vector<16x16xf32>
    %cst_3 = arith.constant 2.500000e-01 : f32
    %3 = vector.broadcast %cst_3 : f32 to vector<16x16xf32>
    %4 = arith.mulf %2, %3 : vector<16x16xf32>
    %cst_4 = arith.constant 0.000000e+00 : f32
    %5 = vector.broadcast %cst_4 : f32 to vector<16x16xf32>
    %6 = arith.maximumf %4, %5 : vector<16x16xf32>
    %c0_5 = arith.constant 0 : index
    %c0_6 = arith.constant 0 : index
    %7 = vector.load %arg3[%c0_5, %c0_6] : memref<16x16xbf16, #tpu.memory_space<vmem>>, vector<16x16xbf16>
    %8 = arith.extf %7 : vector<16x16xbf16> to vector<16x16xf32>
    %c0_7 = arith.constant 0 : index
    %c0_8 = arith.constant 0 : index
    %9 = vector.load %arg4[%c0_7, %c0_8] : memref<16x16xbf16, #tpu.memory_space<vmem>>, vector<16x16xbf16>
    %10 = arith.extf %9 : vector<16x16xbf16> to vector<16x16xf32>
    %cst_9 = arith.constant dense<0.000000e+00> : vector<16xf32>
    %11 = vector.multi_reduction <add>, %6, %cst_9 [1] : vector<16x16xf32> to vector<16xf32>
    %12 = vector.shape_cast %11 : vector<16xf32> to vector<16x1xf32>
    %cst_10 = arith.constant 9.99999996E-13 : f32
    %13 = vector.broadcast %cst_10 : f32 to vector<16x1xf32>
    %14 = arith.maximumf %12, %13 : vector<16x1xf32>
    %15 = vector.broadcast %14 : vector<16x1xf32> to vector<16x16xf32>
    %16 = arith.divf %6, %15 : vector<16x16xf32>
    %cst_11 = arith.constant 5.000000e-01 : f32
    %17 = vector.broadcast %cst_11 : f32 to vector<16x16xf32>
    %18 = arith.mulf %17, %16 : vector<16x16xf32>
    %cst_12 = arith.constant 5.000000e-01 : f32
    %19 = vector.broadcast %cst_12 : f32 to vector<16x16xf32>
    %20 = arith.mulf %19, %10 : vector<16x16xf32>
    %21 = arith.addf %18, %20 : vector<16x16xf32>
    %cst_13 = arith.constant 5.000000e-01 : f32
    %22 = vector.broadcast %cst_13 : f32 to vector<16x16xf32>
    %23 = arith.mulf %22, %6 : vector<16x16xf32>
    %cst_14 = arith.constant 5.000000e-01 : f32
    %24 = vector.broadcast %cst_14 : f32 to vector<16x16xf32>
    %25 = arith.mulf %24, %8 : vector<16x16xf32>
    %26 = arith.addf %23, %25 : vector<16x16xf32>
    %c0_15 = arith.constant 0 : index
    %c0_16 = arith.constant 0 : index
    %27 = vector.load %arg8[%c0_15, %c0_16] : memref<16x16xf32, #tpu.memory_space<vmem>>, vector<16x16xf32>
    tpu.vector_store %arg8[%c0_15, %c0_16], %26 {strides = array<i32>} : memref<16x16xf32, #tpu.memory_space<vmem>>, vector<16x16xf32>,
    %28 = arith.truncf %21 : vector<16x16xf32> to vector<16x16xbf16>
    %c0_17 = arith.constant 0 : index
    %c0_18 = arith.constant 0 : index
    %29 = vector.load %arg9[%c0_17, %c0_18] : memref<16x16xbf16, #tpu.memory_space<vmem>>, vector<16x16xbf16>
    tpu.vector_store %arg9[%c0_17, %c0_18], %28 {strides = array<i32>} : memref<16x16xbf16, #tpu.memory_space<vmem>>, vector<16x16xbf16>,
    %c0_19 = arith.constant 0 : index
    %c0_20 = arith.constant 0 : index
    %30 = vector.load %arg4[%c0_19, %c0_20] : memref<16x16xbf16, #tpu.memory_space<vmem>>, vector<16x16xbf16>
    %31 = tpu.concatenate %30, %28 in 0 : vector<16x16xbf16>, vector<16x16xbf16> -> vector<32x16xbf16>
    %c0_21 = arith.constant 0 : index
    %c0_22 = arith.constant 0 : index
    %32 = vector.load %arg5[%c0_21, %c0_22] : memref<16x32xbf16, #tpu.memory_space<vmem>>, vector<16x32xbf16>
    %cst_23 = arith.constant dense<0.000000e+00> : vector<32x32xf32>
    %33 = tpu.matmul %31, %32, %cst_23 {dimension_numbers = #tpu.dot_dimension_numbers<[1], [0], [0], [1], [0, 0, 1, 1], [], []>} : vector<32x16xbf16>, vector<16x32xbf16>, vector<32x32xf32> -> vector<32x32xf32>
    %cst_24 = arith.constant 0.000000e+00 : f32
    %34 = vector.broadcast %cst_24 : f32 to vector<32x32xf32>
    %35 = arith.maximumf %33, %34 : vector<32x32xf32>
    %36 = arith.truncf %35 : vector<32x32xf32> to vector<32x32xbf16>
    %c0_25 = arith.constant 0 : index
    %c0_26 = arith.constant 0 : index
    %37 = vector.load %arg6[%c0_25, %c0_26] : memref<32x128xbf16, #tpu.memory_space<vmem>>, vector<32x128xbf16>
    %cst_27 = arith.constant dense<0.000000e+00> : vector<32x128xf32>
    %38 = tpu.matmul %36, %37, %cst_27 {dimension_numbers = #tpu.dot_dimension_numbers<[1], [0], [0], [1], [0, 0, 1, 1], [], []>} : vector<32x32xbf16>, vector<32x128xbf16>, vector<32x128xf32> -> vector<32x128xf32>
    %c0_28 = arith.constant 0 : index
    %c0_29 = arith.constant 0 : index
    %39 = vector.load %arg7[%c0_28, %c0_29] : memref<1x128xf32, #tpu.memory_space<vmem>>, vector<1x128xf32>
    %40 = vector.broadcast %39 : vector<1x128xf32> to vector<32x128xf32>
    %41 = arith.addf %38, %40 : vector<32x128xf32>
    %42 = vector.extract_strided_slice %41 {offsets = [0, 0], sizes = [16, 128], strides = [1, 1]} : vector<32x128xf32> to vector<16x128xf32>
    %43 = arith.truncf %42 : vector<16x128xf32> to vector<16x128xbf16>
    %c0_30 = arith.constant 0 : index
    %c0_31 = arith.constant 0 : index
    %c0_32 = arith.constant 0 : index
    %44 = vector.load %arg10[%c0_30, %c0_31, %c0_32] : memref<2x16x128xbf16, #tpu.memory_space<vmem>>, vector<1x16x128xbf16>
    %45 = vector.shape_cast %44 : vector<1x16x128xbf16> to vector<16x128xbf16>
    %46 = vector.shape_cast %43 : vector<16x128xbf16> to vector<1x16x128xbf16>
    tpu.vector_store %arg10[%c0_30, %c0_31, %c0_32], %46 {strides = array<i32>} : memref<2x16x128xbf16, #tpu.memory_space<vmem>>, vector<1x16x128xbf16>,
    %47 = vector.extract_strided_slice %41 {offsets = [16, 0], sizes = [16, 128], strides = [1, 1]} : vector<32x128xf32> to vector<16x128xf32>
    %48 = arith.truncf %47 : vector<16x128xf32> to vector<16x128xbf16>
    %c1 = arith.constant 1 : index
    %c0_33 = arith.constant 0 : index
    %c0_34 = arith.constant 0 : index
    %49 = vector.load %arg10[%c1, %c0_33, %c0_34] : memref<2x16x128xbf16, #tpu.memory_space<vmem>>, vector<1x16x128xbf16>
    %50 = vector.shape_cast %49 : vector<1x16x128xbf16> to vector<16x128xbf16>
    %51 = vector.shape_cast %48 : vector<16x128xbf16> to vector<1x16x128xbf16>
    tpu.vector_store %arg10[%c1, %c0_33, %c0_34], %51 {strides = array<i32>} : memref<2x16x128xbf16, #tpu.memory_space<vmem>>, vector<1x16x128xbf16>,
    return
  }
  func.func @transform_0(%arg0: i32) -> (i32, i32) {
    %c0_i32 = arith.constant 0 : i32
    %c0_i32_0 = arith.constant 0 : i32
    return %arg0, %c0_i32 : i32, i32
  }
  func.func @transform_1(%arg0: i32) -> (i32, i32) {
    %c0_i32 = arith.constant 0 : i32
    %c0_i32_0 = arith.constant 0 : i32
    %c0_i32_1 = arith.constant 0 : i32
    return %c0_i32, %c0_i32_0 : i32, i32
  }
  func.func @transform_2(%arg0: i32) -> (i32, i32) {
    %c0_i32 = arith.constant 0 : i32
    %c0_i32_0 = arith.constant 0 : i32
    return %arg0, %c0_i32 : i32, i32
  }
  func.func @transform_3(%arg0: i32) -> (i32, i32) {
    %c0_i32 = arith.constant 0 : i32
    %c0_i32_0 = arith.constant 0 : i32
    return %arg0, %c0_i32 : i32, i32
  }
  func.func @transform_4(%arg0: i32) -> (i32, i32) {
    %c0_i32 = arith.constant 0 : i32
    %c0_i32_0 = arith.constant 0 : i32
    %c0_i32_1 = arith.constant 0 : i32
    return %c0_i32, %c0_i32_0 : i32, i32
  }
  func.func @transform_5(%arg0: i32) -> (i32, i32) {
    %c0_i32 = arith.constant 0 : i32
    %c0_i32_0 = arith.constant 0 : i32
    %c0_i32_1 = arith.constant 0 : i32
    return %c0_i32, %c0_i32_0 : i32, i32
  }
  func.func @transform_6(%arg0: i32) -> (i32, i32) {
    %c0_i32 = arith.constant 0 : i32
    %c0_i32_0 = arith.constant 0 : i32
    %c0_i32_1 = arith.constant 0 : i32
    return %c0_i32, %c0_i32_0 : i32, i32
  }
  func.func @transform_7(%arg0: i32) -> (i32, i32) {
    %c0_i32 = arith.constant 0 : i32
    %c0_i32_0 = arith.constant 0 : i32
    return %arg0, %c0_i32 : i32, i32
  }
  func.func @transform_8(%arg0: i32) -> (i32, i32) {
    %c0_i32 = arith.constant 0 : i32
    %c0_i32_0 = arith.constant 0 : i32
    return %arg0, %c0_i32 : i32, i32
  }
  func.func @transform_9(%arg0: i32) -> (i32, i32, i32) {
    %c0_i32 = arith.constant 0 : i32
    %c0_i32_0 = arith.constant 0 : i32
    %c0_i32_1 = arith.constant 0 : i32
    return %c0_i32, %arg0, %c0_i32_0 : i32, i32, i32
  }
}

</mosaic_0001>

<llo_original>
// kernel: tpu_custom_call.1
$region0: #{tpu_custom_call.1}
  #allocation0 [shape = 'u32[]', space=smem, size = 0x4, offset = 0x4, fixed_abs, tag = 'smem constant byte address 0x4 - core index']
  #allocation1 [shape = 'u32[144,128]{1,0:T(1,128)}', space=vmem, size = 0x12000, scoped, tag = 'internal scratch']
  %s0 = inlined_call_operand.vmem [shape: bf16[16,128], index: 0, kind: input, shape index: {}]
  %s1 = inlined_call_operand.vmem [shape: bf16[128,16], index: 1, kind: input, shape index: {}]
  %s2 = inlined_call_operand.vmem [shape: bf16[16,16], index: 2, kind: input, shape index: {}]
  %s3 = inlined_call_operand.vmem [shape: bf16[16,16], index: 3, kind: input, shape index: {}]
  %s4 = inlined_call_operand.vmem [shape: bf16[16,32], index: 4, kind: input, shape index: {}]
  %s5 = inlined_call_operand.vmem [shape: bf16[32,128], index: 5, kind: input, shape index: {}]
  %s6 = inlined_call_operand.vmem [shape: f32[1,128], index: 6, kind: input, shape index: {}]
  %s7 = inlined_call_operand.hbm [shape: f32[16,16], index: 7, kind: output, shape index: {0}]
  %s8 = inlined_call_operand.hbm [shape: bf16[16,16], index: 8, kind: output, shape index: {1}]
  %s9 = inlined_call_operand.hbm [shape: bf16[2,16,128], index: 9, kind: output, shape index: {2}]
  %10 = xla_tuple %s7, %s8, %s9
  %s11 = sld [smem:[#allocation0]]
  $region54: #{tpu_custom_call.1} parent=0
    _
  %s13 = ssub.s32 1, %s11
  %s14 = scalar_select 0, %s13, %s11
  $region1: #{tpu_custom_call.1} parent=0
    #allocation2 [shape = 'u8[8192]{0}', space=vmem, size = 0x2000, scoped, tag = 'output window, operand 0, single buffered']
    #allocation3 [shape = 's32[1]{0}', space=sflag, size = 0x4, scoped, tag = 'scoped memory for tpu_custom_call.1']
    #allocation4 [shape = 'u8[4096]{0}', space=vmem, size = 0x1000, scoped, tag = 'output window, operand 1, single buffered']
    #allocation5 [shape = 's32[1]{0}', space=sflag, size = 0x4, scoped, tag = 'scoped memory for tpu_custom_call.1']
    #allocation6 [shape = 'u8[8192]{0}', space=vmem, size = 0x2000, scoped, tag = 'output window, operand 2, single buffered']
    %15 = vsyncpa [#allocation3], 0
    %16 = vsyncpa [#allocation5], 0
    // Predicated region
    $region2: #{tpu_custom_call.1} parent=1 // pred_check
      _
    $region3: #{tpu_custom_call.1} parent=1 // pred_check_branch
      %18 = sbr.rel (0) target = $region5
    $region4: #{tpu_custom_call.1} parent=1 // pred_region
      _
    $region5: #{tpu_custom_call.1} parent=1 // pred_fallthru
      _
    // Predicated region
    $region6: #{tpu_custom_call.1} parent=1 // pred_check
      _
    $region7: #{tpu_custom_call.1} parent=1 // pred_check_branch
      %20 = sbr.rel (0) target = $region9
    $region8: #{tpu_custom_call.1} parent=1 // pred_region
      _
    $region9: #{tpu_custom_call.1} parent=1 // pred_fallthru
      _
    // Predicated region
    $region10: #{tpu_custom_call.1} parent=1 // pred_check
      _
    $region11: #{tpu_custom_call.1} parent=1 // pred_check_branch
      %22 = sbr.rel (0) target = $region13
    $region12: #{tpu_custom_call.1} parent=1 // pred_region
      _
    $region13: #{tpu_custom_call.1} parent=1 // pred_fallthru
      _
    // Predicated region
    $region14: #{tpu_custom_call.1} parent=1 // pred_check
      _
    $region15: #{tpu_custom_call.1} parent=1 // pred_check_branch
      %24 = sbr.rel (0) target = $region17
    $region16: #{tpu_custom_call.1} parent=1 // pred_region
      _
    $region17: #{tpu_custom_call.1} parent=1 // pred_fallthru
      _
    // Predicated region
    $region18: #{tpu_custom_call.1} parent=1 // pred_check
      _
    $region19: #{tpu_custom_call.1} parent=1 // pred_check_branch
      %26 = sbr.rel (0) target = $region21
    $region20: #{tpu_custom_call.1} parent=1 // pred_region
      _
    $region21: #{tpu_custom_call.1} parent=1 // pred_fallthru
      _
    // Predicated region
    $region22: #{tpu_custom_call.1} parent=1 // pred_check
      _
    $region23: #{tpu_custom_call.1} parent=1 // pred_check_branch
      %28 = sbr.rel (0) target = $region25
    $region24: #{tpu_custom_call.1} parent=1 // pred_region
      _
    $region25: #{tpu_custom_call.1} parent=1 // pred_fallthru
      _
    // Predicated region
    $region26: #{tpu_custom_call.1} parent=1 // pred_check
      _
    $region27: #{tpu_custom_call.1} parent=1 // pred_check_branch
      %30 = sbr.rel (0) target = $region29
    $region28: #{tpu_custom_call.1} parent=1 // pred_region
      _
    $region29: #{tpu_custom_call.1} parent=1 // pred_fallthru
      _
    %v32 = vld [vmem:[%s0] sm:$0xf]
    %v33 = vld [vmem:[%s0 + $0x4] sm:$0xf]
    %v34 = vld [vmem:[%s1] sm:$0xf]
    %v35 = vld [vmem:[%s1 + $0x4] sm:$0xf]
    %v36 = vld [vmem:[%s1 + $0x8] sm:$0xf]
    %v37 = vld [vmem:[%s1 + $0xc] sm:$0xf]
    %v38 = vld [vmem:[%s1 + $0x10] sm:$0xf]
    %v39 = vld [vmem:[%s1 + $0x14] sm:$0xf]
    %v40 = vld [vmem:[%s1 + $0x18] sm:$0xf]
    %v41 = vld [vmem:[%s1 + $0x1c] sm:$0xf]
    %v42 = vld [vmem:[%s1 + $0x20] sm:$0xf]
    %v43 = vld [vmem:[%s1 + $0x24] sm:$0xf]
    %v44 = vld [vmem:[%s1 + $0x28] sm:$0xf]
    %v45 = vld [vmem:[%s1 + $0x2c] sm:$0xf]
    %v46 = vld [vmem:[%s1 + $0x30] sm:$0xf]
    %v47 = vld [vmem:[%s1 + $0x34] sm:$0xf]
    %v48 = vld [vmem:[%s1 + $0x38] sm:$0xf]
    %v49 = vld [vmem:[%s1 + $0x3c] sm:$0xf]
    %v52 = vunpack.c.l.b16 %v32
    %v53 = vunpack.c.l.b16 %v33
    %v54 = vpack.c.b16 %v53, %v52
    %v72 = vunpack.c.l.b16 %v34
    %v73 = vunpack.c.l.b16 %v35
    %v74 = vunpack.c.l.b16 %v36
    %v75 = vunpack.c.l.b16 %v37
    %v76 = vunpack.c.l.b16 %v38
    %v77 = vunpack.c.l.b16 %v39
    %v78 = vunpack.c.l.b16 %v40
    %v79 = vunpack.c.l.b16 %v41
    %v80 = vunpack.c.l.b16 %v42
    %v81 = vunpack.c.l.b16 %v43
    %v82 = vunpack.c.l.b16 %v44
    %v83 = vunpack.c.l.b16 %v45
    %v84 = vunpack.c.l.b16 %v46
    %v85 = vunpack.c.l.b16 %v47
    %v86 = vunpack.c.l.b16 %v48
    %v87 = vunpack.c.l.b16 %v49
    %v88 = vpack.c.b16 %v73, %v72
    %v89 = vpack.c.b16 %v75, %v74
    %v90 = vpack.c.b16 %v77, %v76
    %v91 = vpack.c.b16 %v79, %v78
    %v92 = vpack.c.b16 %v81, %v80
    %v93 = vpack.c.b16 %v83, %v82
    %v94 = vpack.c.b16 %v85, %v84
    %v95 = vpack.c.b16 %v87, %v86
    %104 = vmatprep.subr.bf16.mxu0 0
    %105 = vmatpush1.bf16.msra.mxu0 %v95
    %106 = vmatprep.subr.bf16.mxu0 0
    %107 = vmatpush1.bf16.msra.mxu0 %v94
    %108 = vmatprep.subr.bf16.mxu0 0
    %109 = vmatpush1.bf16.msra.mxu0 %v93
    %110 = vmatprep.subr.bf16.mxu0 0
    %111 = vmatpush1.bf16.msra.mxu0 %v92
    %112 = vmatprep.subr.bf16.mxu0 0
    %113 = vmatpush1.bf16.msra.mxu0 %v91
    %114 = vmatprep.subr.bf16.mxu0 0
    %115 = vmatpush1.bf16.msra.mxu0 %v90
    %116 = vmatprep.subr.bf16.mxu0 0
    %117 = vmatpush1.bf16.msra.mxu0 %v89
    %118 = vmatprep.subr.bf16.mxu0 0
    %119 = vmatpush1.bf16.msra.mxu0 %v88
    %120 = vmatprep.subr.bf16.mxu0 0
    %121 = vmatpush2.bf16.msra.mxu0 0
    %122 = vmatprep.subr.bf16.mxu0 0
    %123 = vmatpush2.bf16.msra.mxu0 0
    %124 = vmatprep.subr.bf16.mxu0 0
    %125 = vmatpush2.bf16.msra.mxu0 0
    %126 = vmatprep.subr.bf16.mxu0 0
    %127 = vmatpush2.bf16.msra.mxu0 0
    %128 = vmatprep.subr.bf16.mxu0 0
    %129 = vmatpush2.bf16.msra.mxu0 0
    %130 = vmatprep.subr.bf16.mxu0 0
    %131 = vmatpush2.bf16.msra.mxu0 0
    %132 = vmatprep.subr.bf16.mxu0 0
    %133 = vmatpush2.bf16.msra.mxu0 0
    %134 = vmatprep.subr.bf16.mxu0 0
    %135 = vmatpush2.bf16.msra.mxu0 0
    %136 = vmatprep.mubr.bf16.mxu0 0
    %137 = vmatmul.mubr.bf16.gmra.mxu0 %v54
    %v138 = vpop.f32.mrf.mxu0
    %v139 = vadd.f32 0.0, %v138
    %v140 = vpop.f32.mrf.mxu0
    %v141 = vpop.f32.mrf.mxu0
    %v142 = vadd.f32 0.0, %v141
    %v143 = vpop.f32.mrf.mxu0
    %144 = vdwg.mxu0
    %v145 = vmul.f32 %v139, 0.25
    %v146 = vmul.f32 %v142, 0.25
    %v147 = vmax.f32 %v145, 0.0
    %v148 = vmax.f32 %v146, 0.0
    %v149 = vld [vmem:[%s2] sm:$0xf]
    %v150 = vld [vmem:[%s2 + $0x4] sm:$0xf]
    %v151 = vunpack.c.l.bf16 %v149
    %v152 = vunpack.c.l.bf16 %v150
    %v153 = vld [vmem:[%s3] sm:$0xf]
    %v154 = vld [vmem:[%s3 + $0x4] sm:$0xf]
    %v155 = vunpack.c.l.bf16 %v153
    %v156 = vunpack.c.l.bf16 %v154
    %vm157 = vcmask 130048
    %v158 = vsel %vm157, %v147, 0.0
    %159 = vadd.xlane.f32.xlu0 %v158
    %v160 = vpop.xlane.xlu0 %159
    %v161 = vsel %vm157, %v148, 0.0
    %162 = vadd.xlane.f32.xlu0 %v161
    %v163 = vpop.xlane.xlu0 %162
    %v164 = vmax.f32 %v160, 1e-12
    %v165 = vmax.f32 %v163, 1e-12
    %v166 = vrcp.pop %v164
    %v167 = vmul.f32 %v147, %v166
    %v168 = vrcp.pop %v165
    %v169 = vmul.f32 %v148, %v168
    %v170 = vmul.f32 %v167, 0.5
    %v171 = vmul.f32 %v169, 0.5
    %v172 = vmul.f32 %v155, 0.5
    %v173 = vmul.f32 %v156, 0.5
    %v174 = vadd.f32 %v170, %v172
    %v175 = vadd.f32 %v171, %v173
    %v176 = vmul.f32 %v147, 0.5
    %v177 = vmul.f32 %v148, 0.5
    %v178 = vmul.f32 %v151, 0.5
    %v179 = vmul.f32 %v152, 0.5
    %v180 = vadd.f32 %v176, %v178
    %v181 = vadd.f32 %v177, %v179
    %182 = vst.msk [vmem:[#allocation2] sm:$0xff] %vm157, %v180
    %183 = vst.msk [vmem:[#allocation2 + $0x8] sm:$0xff] %vm157, %v181
    %v184 = vpack.c.bf16 %v175, %v174
    %v186 = vunpack.c.l.b16 %v184
    %v187 = vunpack.c.h.b16 %v184
    %v188 = vpack.c.b16 %v186, %v186
    %v189 = vpack.c.b16 %v187, %v187
    %vm192 = vcmask 125952
    %193 = vst.msk [vmem:[#allocation4] sm:$0xf] %vm192, %v188
    %194 = vst.msk [vmem:[#allocation4 + $0x4] sm:$0xf] %vm192, %v189
    %v195 = vld [vmem:[%s3] sm:$0xf]
    %v196 = vld [vmem:[%s3 + $0x4] sm:$0xf]
    %v199 = vunpack.c.l.b16 %v195
    %v200 = vunpack.c.l.b16 %v196
    %v201 = vpack.c.b16 %v200, %v199
    %v202 = vld [vmem:[%s4] sm:$0xf]
    %v203 = vld [vmem:[%s4 + $0x4] sm:$0xf]
    %v206 = vunpack.c.l.b16 %v202
    %v207 = vunpack.c.l.b16 %v203
    %v208 = vpack.c.b16 %v207, %v206
    %v211 = vsel %vm157, %v201, 0
    %v214 = vsel %vm157, %v184, 0
    %216 = vmatprep.subr.bf16.mxu0 0
    %217 = vmatpush1.bf16.msra.mxu0 0
    %218 = vmatprep.subr.bf16.mxu0 0
    %219 = vmatpush1.bf16.msra.mxu0 0
    %220 = vmatprep.subr.bf16.mxu0 0
    %221 = vmatpush1.bf16.msra.mxu0 0
    %222 = vmatprep.subr.bf16.mxu0 0
    %223 = vmatpush1.bf16.msra.mxu0 0
    %224 = vmatprep.subr.bf16.mxu0 0
    %225 = vmatpush1.bf16.msra.mxu0 0
    %226 = vmatprep.subr.bf16.mxu0 0
    %227 = vmatpush1.bf16.msra.mxu0 0
    %228 = vmatprep.subr.bf16.mxu0 0
    %229 = vmatpush1.bf16.msra.mxu0 0
    %230 = vmatprep.subr.bf16.mxu0 0
    %231 = vmatpush1.bf16.msra.mxu0 %v208
    %232 = vmatprep.subr.bf16.mxu0 0
    %233 = vmatpush2.bf16.msra.mxu0 0
    %234 = vmatprep.subr.bf16.mxu0 0
    %235 = vmatpush2.bf16.msra.mxu0 0
    %236 = vmatprep.subr.bf16.mxu0 0
    %237 = vmatpush2.bf16.msra.mxu0 0
    %238 = vmatprep.subr.bf16.mxu0 0
    %239 = vmatpush2.bf16.msra.mxu0 0
    %240 = vmatprep.subr.bf16.mxu0 0
    %241 = vmatpush2.bf16.msra.mxu0 0
    %242 = vmatprep.subr.bf16.mxu0 0
    %243 = vmatpush2.bf16.msra.mxu0 0
    %244 = vmatprep.subr.bf16.mxu0 0
    %245 = vmatpush2.bf16.msra.mxu0 0
    %246 = vmatprep.subr.bf16.mxu0 0
    %247 = vmatpush2.bf16.msra.mxu0 0
    %248 = vmatprep.mubr.bf16.mxu0 0
    %249 = vmatmul.mubr.bf16.gmra.mxu0 %v211
    %v250 = vpop.f32.mrf.mxu0
    %v251 = vadd.f32 0.0, %v250
    %v252 = vpop.f32.mrf.mxu0
    %v253 = vpop.f32.mrf.mxu0
    %v254 = vadd.f32 0.0, %v253
    %v255 = vpop.f32.mrf.mxu0
    %256 = vmatprep.mubr.bf16.mxu0 0
    %257 = vmatmul.mubr.bf16.gmra.mxu0 %v214
    %v258 = vpop.f32.mrf.mxu0
    %v259 = vadd.f32 0.0, %v258
    %v260 = vpop.f32.mrf.mxu0
    %v261 = vpop.f32.mrf.mxu0
    %v262 = vadd.f32 0.0, %v261
    %v263 = vpop.f32.mrf.mxu0
    %264 = vdwg.mxu0
    %v265 = vmax.f32 %v251, 0.0
    %v266 = vmax.f32 %v254, 0.0
    %v267 = vmax.f32 %v259, 0.0
    %v268 = vmax.f32 %v262, 0.0
    %v269 = vpack.c.bf16 %v266, %v265
    %v270 = vpack.c.bf16 %v268, %v267
    %v271 = vld [vmem:[%s5] sm:$0xf]
    %v272 = vld [vmem:[%s5 + $0x4] sm:$0xf]
    %v273 = vld [vmem:[%s5 + $0x8] sm:$0xf]
    %v274 = vld [vmem:[%s5 + $0xc] sm:$0xf]
    %v275 = vld [vmem:[%s6] sm:$0x1]
    %v277 = vlaneseq
    %v278 = vshrl.u32 %v277, 7
    %v279 = vsub.s32 0, %v278
    %v280 = vrot.slane %v275, %v279
    %v286 = vunpack.c.l.b16 %v271
    %v287 = vunpack.c.l.b16 %v272
    %v288 = vunpack.c.l.b16 %v273
    %v289 = vunpack.c.l.b16 %v274
    %v290 = vpack.c.b16 %v287, %v286
    %v291 = vpack.c.b16 %v289, %v288
    %vm294 = vcmask 261120
    %v296 = vsel %vm294, %v269, 0
    %v299 = vsel %vm294, %v270, 0
    %301 = vmatprep.subr.bf16.mxu0 0
    %302 = vmatpush1.bf16.msra.mxu0 0
    %303 = vmatprep.subr.bf16.mxu0 0
    %304 = vmatpush1.bf16.msra.mxu0 0
    %305 = vmatprep.subr.bf16.mxu0 0
    %306 = vmatpush1.bf16.msra.mxu0 0
    %307 = vmatprep.subr.bf16.mxu0 0
    %308 = vmatpush1.bf16.msra.mxu0 0
    %309 = vmatprep.subr.bf16.mxu0 0
    %310 = vmatpush1.bf16.msra.mxu0 0
    %311 = vmatprep.subr.bf16.mxu0 0
    %312 = vmatpush1.bf16.msra.mxu0 0
    %313 = vmatprep.subr.bf16.mxu0 0
    %314 = vmatpush1.bf16.msra.mxu0 %v291
    %315 = vmatprep.subr.bf16.mxu0 0
    %316 = vmatpush1.bf16.msra.mxu0 %v290
    %317 = vmatprep.subr.bf16.mxu0 0
    %318 = vmatpush2.bf16.msra.mxu0 0
    %319 = vmatprep.subr.bf16.mxu0 0
    %320 = vmatpush2.bf16.msra.mxu0 0
    %321 = vmatprep.subr.bf16.mxu0 0
    %322 = vmatpush2.bf16.msra.mxu0 0
    %323 = vmatprep.subr.bf16.mxu0 0
    %324 = vmatpush2.bf16.msra.mxu0 0
    %325 = vmatprep.subr.bf16.mxu0 0
    %326 = vmatpush2.bf16.msra.mxu0 0
    %327 = vmatprep.subr.bf16.mxu0 0
    %328 = vmatpush2.bf16.msra.mxu0 0
    %329 = vmatprep.subr.bf16.mxu0 0
    %330 = vmatpush2.bf16.msra.mxu0 0
    %331 = vmatprep.subr.bf16.mxu0 0
    %332 = vmatpush2.bf16.msra.mxu0 0
    %333 = vmatprep.mubr.bf16.mxu0 0
    %334 = vmatmul.mubr.bf16.gmra.mxu0 %v296
    %v335 = vpop.f32.mrf.mxu0
    %v336 = vadd.f32 %v280, %v335
    %v337 = vpop.f32.mrf.mxu0
    %v338 = vpop.f32.mrf.mxu0
    %v339 = vadd.f32 %v280, %v338
    %v340 = vpop.f32.mrf.mxu0
    %341 = vmatprep.mubr.bf16.mxu0 0
    %342 = vmatmul.mubr.bf16.gmra.mxu0 %v299
    %v343 = vpop.f32.mrf.mxu0
    %v344 = vadd.f32 %v280, %v343
    %v345 = vpop.f32.mrf.mxu0
    %v346 = vpop.f32.mrf.mxu0
    %v347 = vadd.f32 %v280, %v346
    %v348 = vpop.f32.mrf.mxu0
    %349 = vdwg.mxu0
    %v350 = vpack.c.bf16 %v339, %v336
    %v352 = vunpack.c.l.b16 %v350
    %v353 = vunpack.c.h.b16 %v350
    %v354 = vpack.c.b16 %v352, %v352
    %v355 = vpack.c.b16 %v353, %v353
    %358 = vst [vmem:[#allocation6] sm:$0xf] %v354
    %359 = vst [vmem:[#allocation6 + $0x4] sm:$0xf] %v355
    %v360 = vpack.c.bf16 %v347, %v344
    %v362 = vunpack.c.l.b16 %v360
    %v363 = vunpack.c.h.b16 %v360
    %v364 = vpack.c.b16 %v362, %v362
    %v365 = vpack.c.b16 %v363, %v363
    %s368 = scalar_lea.vmem [#allocation6], 8
    %369 = vst [vmem:[%s368] sm:$0xf] %v364
    %370 = vst [vmem:[%s368 + $0x4] sm:$0xf] %v365
    // Predicated region
    $region30: #{tpu_custom_call.1} parent=1 // pred_check
      _
    $region31: #{tpu_custom_call.1} parent=1 // pred_check_branch
      %372 = sbr.rel (0) target = $region33
    $region32: #{tpu_custom_call.1} parent=1 // pred_region
      %s374 = ssub.s32 256, 256
      %375 = vsyncadd [#allocation3], %s374
      %s376 = sshll.u32 [#allocation2], 4
      %s377 = int_to_ptr.vmem [resolvable:$true] %s376
      %382 = dma.vmem_to_hbm [thread:$0]  %s377, 256, %s7, [#allocation3], 128, 128, 8
    $region33: #{tpu_custom_call.1} parent=1 // pred_fallthru
      _
    // Predicated region
    $region34: #{tpu_custom_call.1} parent=1 // pred_check
      _
    $region35: #{tpu_custom_call.1} parent=1 // pred_check_branch
      %384 = sbr.rel (0) target = $region37
    $region36: #{tpu_custom_call.1} parent=1 // pred_region
      %s386 = ssub.s32 128, 128
      %387 = vsyncadd [#allocation5], %s386
      %s388 = sshll.u32 [#allocation4], 4
      %s389 = int_to_ptr.vmem [resolvable:$true] %s388
      %394 = dma.vmem_to_hbm [thread:$0]  %s389, 128, %s8, [#allocation5], 64, 64, 4
    $region37: #{tpu_custom_call.1} parent=1 // pred_fallthru
      _
    // Predicated region
    $region38: #{tpu_custom_call.1} parent=1 // pred_check
      _
    $region39: #{tpu_custom_call.1} parent=1 // pred_check_branch
      %396 = sbr.rel (0) target = $region41
    $region40: #{tpu_custom_call.1} parent=1 // pred_region
      %s398 = ssub.s32 256, 256
      %399 = vsyncadd [#allocation5], %s398
      %s400 = sshll.u32 [#allocation6], 4
      %s401 = int_to_ptr.vmem [resolvable:$true] %s400
      %406 = dma.vmem_to_hbm [thread:$0]  %s401, 256, %s9, [#allocation5], 64, 64, 4
    $region41: #{tpu_custom_call.1} parent=1 // pred_fallthru
      _
    // Predicated region
    $region42: #{tpu_custom_call.1} parent=1 // pred_check
      _
    $region43: #{tpu_custom_call.1} parent=1 // pred_check_branch
      %408 = sbr.rel (0) target = $region45
    $region44: #{tpu_custom_call.1} parent=1 // pred_region
      %409 = dma.done [#allocation3], 256
    $region45: #{tpu_custom_call.1} parent=1 // pred_fallthru
      _
    // Predicated region
    $region46: #{tpu_custom_call.1} parent=1 // pred_check
      _
    $region47: #{tpu_custom_call.1} parent=1 // pred_check_branch
      %411 = sbr.rel (0) target = $region49
    $region48: #{tpu_custom_call.1} parent=1 // pred_region
      %412 = dma.done [#allocation5], 128
    $region49: #{tpu_custom_call.1} parent=1 // pred_fallthru
      _
    // Predicated region
    $region50: #{tpu_custom_call.1} parent=1 // pred_check
      _
    $region51: #{tpu_custom_call.1} parent=1 // pred_check_branch
      %414 = sbr.rel (0) target = $region53
    $region52: #{tpu_custom_call.1} parent=1 // pred_region
      %415 = dma.done [#allocation5], 256
    $region53: #{tpu_custom_call.1} parent=1 // pred_fallthru
      _
    %416 = vsyncpa [#allocation3], 1
    %417 = vsyncpa [#allocation5], 1

</llo_original>
